<compile_context>
chip_gen: v5e
topology: v5e:2x2
jax: 0.10.0
libtpu: 0.0.40
codegen_flags: <defaults>
</compile_context>

<pallas_src>
import numpy as np
import jax
import jax.numpy as jnp
from jax import lax
from jax.experimental import pallas as pl
from jax.experimental.pallas import tpu as pltpu


def _round_up(x: int, m: int) -> int:
    return ((x + m - 1) // m) * m


def _pick_tile_t(T: int) -> int:
    """Pick the frame-tile: minimize padded frame count, prefer larger tiles on ties."""
    cap = _round_up(T, 8)
    cands = {c for c in (512, 256, 128, 64) if c <= cap}
    if cap <= 512:
        cands.add(cap)          # e.g. T=257 -> tile 264: one step, near-zero waste
    if not cands:
        cands = {cap}
    return min(cands, key=lambda c: (_round_up(T, c), -c))


def _stft_kernel(lo_ref, hi_ref, btop_ref, bbot_ref, out_ref):
    # lo/hi: (TILE_T, hop) bf16 -> first/second half of each frame (hop = n_fft // 2).
    # btop/bbot: (hop, 512) bf16 window-folded, real/imag-interleaved DFT basis halves
    # (resident in VMEM).  One lane-dense (TILE_T, 512) f32 store per grid step.
    out_ref[...] = (
        jnp.dot(lo_ref[...], btop_ref[...], preferred_element_type=jnp.float32)
        + jnp.dot(hi_ref[...], bbot_ref[...], preferred_element_type=jnp.float32)
    )


class PreProcessing:
    def __init__(self, input_samplerate=16000, resample_samplerate=16000,
                 window_length_ms=30):
        # torchaudio.transforms.Resample(16000, 16000) is an exact identity.
        assert input_samplerate == resample_samplerate
        self.n_fft = 2 * window_length_ms * resample_samplerate // 2000   # 480
        self.hop = self.n_fft // 2                                        # 240
        self.output_size = (self.n_fft + 2) // 2                          # 241
        self.n_out = _round_up(2 * self.output_size, 128)                 # 512

        n = np.arange(self.n_fft, dtype=np.float64)
        k = np.arange(self.output_size, dtype=np.float64)
        ang = 2.0 * np.pi * np.outer(n, k) / self.n_fft
        # periodic Hann window (torch.hann_window default), folded into the basis.
        win = 0.5 - 0.5 * np.cos(2.0 * np.pi * n / self.n_fft)
        basis = np.zeros((self.n_fft, self.n_out), dtype=np.float64)
        basis[:, 0:2 * self.output_size:2] = np.cos(ang) * win[:, None]    # real
        basis[:, 1:2 * self.output_size:2] = -np.sin(ang) * win[:, None]   # imag
        # Split along K so each frame half multiplies its own basis half; bf16 weights.
        self.basis_top = jnp.asarray(basis[: self.hop], jnp.bfloat16)      # (240, 512)
        self.basis_bot = jnp.asarray(basis[self.hop:], jnp.bfloat16)       # (240, 512)

    def __call__(self, waveform: jax.Array) -> jax.Array:
        B, L = waveform.shape
        hop, n_fft, n_out = self.hop, self.n_fft, self.n_out
        pad = n_fft // 2            # == hop
        assert L > pad, "reflect padding requires L > n_fft // 2"

        T = 1 + L // hop
        tile_t = _pick_tile_t(T)
        t_pad = _round_up(T, tile_t)

        # Single fused pad: reflect halo (center=True, pad_mode="reflect") + zero tail
        # so both hop-chunk views cover t_pad frames.  bf16 halves wrapper + DMA bytes.
        x = waveform.astype(jnp.bfloat16)
        left = x[:, 1:pad + 1][:, ::-1]
        right = x[:, L - pad - 1:L - 1][:, ::-1]
        need = (t_pad + 1) * hop
        extra = max(0, need - (L + 2 * pad))
        parts = [left, x, right]
        if extra:
            parts.append(jnp.zeros((B, extra), jnp.bfloat16))
        padded = jnp.concatenate(parts, axis=1)

        # Frame t = [chunk_t ; chunk_{t+1}]  (hop = n_fft / 2): two blocked chunk streams.
        lo = padded[:, : t_pad * hop].reshape(B, t_pad, hop)
        hi = padded[:, hop:(t_pad + 1) * hop].reshape(B, t_pad, hop)

        grid = (B, t_pad // tile_t)
        cost = pl.CostEstimate(
            flops=4 * B * t_pad * hop * n_out,
            transcendentals=0,
            bytes_accessed=(2 * B * t_pad * hop * 2        # lo + hi (bf16)
                            + 2 * hop * n_out * 2          # basis halves (bf16)
                            + B * t_pad * n_out * 4),      # f32 output
        )

        out = pl.pallas_call(
            _stft_kernel,
            out_shape=jax.ShapeDtypeStruct((B, t_pad, n_out), jnp.float32),
            grid=grid,
            in_specs=[
                pl.BlockSpec((None, tile_t, hop), lambda b, j: (b, j, 0)),
                pl.BlockSpec((None, tile_t, hop), lambda b, j: (b, j, 0)),
                pl.BlockSpec((hop, n_out), lambda b, j: (0, 0)),   # resident basis (top)
                pl.BlockSpec((hop, n_out), lambda b, j: (0, 0)),   # resident basis (bottom)
            ],
            out_specs=pl.BlockSpec((None, tile_t, n_out), lambda b, j: (b, j, 0)),
            compiler_params=pltpu.CompilerParams(
                dimension_semantics=("parallel", "parallel"),
                vmem_limit_bytes=32 * 1024 * 1024,
            ),
            cost_estimate=cost,
        )(lo, hi, self.basis_top, self.basis_bot)

        # Interleaved epilogue: one dense contiguous slice, pairwise complex assembly.
        pair = out[:, :T, : 2 * self.output_size].reshape(B, T, self.output_size, 2)
        return lax.complex(pair[..., 0], pair[..., 1])     # (B, T, 241) complex64


if __name__ == "__main__":
    pre = PreProcessing()  # n_fft=480, hop=240, F=241

    key = jax.random.PRNGKey(0)
    B, L = 2, 1920                       # 0.12 s of 16 kHz audio
    waveform = jax.random.normal(key, (B, L), dtype=jnp.float32)

    out = jax.block_until_ready(pre(waveform))

    T = 1 + L // pre.hop                 # 9
    assert out.shape == (B, T, pre.output_size), out.shape
    assert out.dtype == jnp.complex64, out.dtype

    # float64 numpy reference of the same windowed DFT (checks framing/tiling plumbing).
    wav = np.asarray(waveform, np.float64)
    pad = pre.n_fft // 2
    pad_np = np.pad(wav, ((0, 0), (pad, pad)), mode="reflect")
    n = np.arange(pre.n_fft, dtype=np.float64)
    k = np.arange(pre.output_size, dtype=np.float64)
    ang = 2.0 * np.pi * np.outer(n, k) / pre.n_fft
    win = 0.5 - 0.5 * np.cos(2.0 * np.pi * n / pre.n_fft)
    ref = np.zeros((B, T, pre.output_size), dtype=np.complex128)
    for t in range(T):
        fr = pad_np[:, t * pre.hop: t * pre.hop + pre.n_fft] * win
        ref[:, t, :] = fr @ np.cos(ang) - 1j * (fr @ np.sin(ang))

    got = np.asarray(out)
    # bf16 inputs/basis with f32 accumulation: ~1e-3 relative error overall, but small
    # individual bins can see O(0.05) absolute error -> norm check + loose allclose.
    rel_fro = np.linalg.norm(got - ref) / np.linalg.norm(ref)
    assert rel_fro < 1e-2, f"relative Frobenius error too large: {rel_fro}"
    assert np.allclose(got, ref, atol=2e-1, rtol=5e-2), "mismatch vs reference STFT"

    print("KERNEL_OK")
</pallas_src>

<mosaic_0001>
module attributes {stable_mosaic.version = 11 : i64} {
  func.func @_stft_kernel(%arg0: i32, %arg1: i32, %arg2: memref<1x16x240xbf16, #tpu.memory_space<vmem>>, %arg3: memref<1x16x240xbf16, #tpu.memory_space<vmem>>, %arg4: memref<240x512xbf16, #tpu.memory_space<vmem>>, %arg5: memref<240x512xbf16, #tpu.memory_space<vmem>>, %arg6: memref<1x16x512xf32, #tpu.memory_space<vmem>>) attributes {dimension_semantics = [#tpu.dimension_semantics<parallel>, #tpu.dimension_semantics<parallel>], iteration_bounds = array<i64: 2, 1>, scalar_prefetch = 0 : i64, scratch_operands = 0 : i64, tpu.core_type = #tpu.core_type<tc>, window_params = [{transform_indices = @transform_0, window_bounds = array<i64: 1, 16, 240>}, {transform_indices = @transform_1, window_bounds = array<i64: 1, 16, 240>}, {pipeline_mode = #tpu.pipeline_mode<synchronous>, transform_indices = @transform_2, window_bounds = array<i64: 240, 512>}, {pipeline_mode = #tpu.pipeline_mode<synchronous>, transform_indices = @transform_3, window_bounds = array<i64: 240, 512>}, {transform_indices = @transform_4, window_bounds = array<i64: 1, 16, 512>}]} {
    %c0 = arith.constant 0 : index
    %c0_0 = arith.constant 0 : index
    %c0_1 = arith.constant 0 : index
    %0 = vector.load %arg2[%c0, %c0_0, %c0_1] : memref<1x16x240xbf16, #tpu.memory_space<vmem>>, vector<1x16x240xbf16>
    %1 = vector.shape_cast %0 : vector<1x16x240xbf16> to vector<16x240xbf16>
    %c0_2 = arith.constant 0 : index
    %c0_3 = arith.constant 0 : index
    %2 = vector.load %arg4[%c0_2, %c0_3] : memref<240x512xbf16, #tpu.memory_space<vmem>>, vector<240x512xbf16>
    %cst = arith.constant dense<0.000000e+00> : vector<16x512xf32>
    %3 = tpu.matmul %1, %2, %cst {dimension_numbers = #tpu.dot_dimension_numbers<[1], [0], [0], [1], [0, 0, 1, 1], [], []>} : vector<16x240xbf16>, vector<240x512xbf16>, vector<16x512xf32> -> vector<16x512xf32>
    %c0_4 = arith.constant 0 : index
    %c0_5 = arith.constant 0 : index
    %c0_6 = arith.constant 0 : index
    %4 = vector.load %arg3[%c0_4, %c0_5, %c0_6] : memref<1x16x240xbf16, #tpu.memory_space<vmem>>, vector<1x16x240xbf16>
    %5 = vector.shape_cast %4 : vector<1x16x240xbf16> to vector<16x240xbf16>
    %c0_7 = arith.constant 0 : index
    %c0_8 = arith.constant 0 : index
    %6 = vector.load %arg5[%c0_7, %c0_8] : memref<240x512xbf16, #tpu.memory_space<vmem>>, vector<240x512xbf16>
    %cst_9 = arith.constant dense<0.000000e+00> : vector<16x512xf32>
    %7 = tpu.matmul %5, %6, %cst_9 {dimension_numbers = #tpu.dot_dimension_numbers<[1], [0], [0], [1], [0, 0, 1, 1], [], []>} : vector<16x240xbf16>, vector<240x512xbf16>, vector<16x512xf32> -> vector<16x512xf32>
    %8 = arith.addf %3, %7 : vector<16x512xf32>
    %c0_10 = arith.constant 0 : index
    %c0_11 = arith.constant 0 : index
    %c0_12 = arith.constant 0 : index
    %9 = vector.load %arg6[%c0_10, %c0_11, %c0_12] : memref<1x16x512xf32, #tpu.memory_space<vmem>>, vector<1x16x512xf32>
    %10 = vector.shape_cast %9 : vector<1x16x512xf32> to vector<16x512xf32>
    %11 = vector.shape_cast %8 : vector<16x512xf32> to vector<1x16x512xf32>
    tpu.vector_store %arg6[%c0_10, %c0_11, %c0_12], %11 {strides = array<i32>} : memref<1x16x512xf32, #tpu.memory_space<vmem>>, vector<1x16x512xf32>,
    return
  }
  func.func @transform_0(%arg0: i32, %arg1: i32) -> (i32, i32, i32) {
    %c0_i32 = arith.constant 0 : i32
    %c0_i32_0 = arith.constant 0 : i32
    return %arg0, %arg1, %c0_i32 : i32, i32, i32
  }
  func.func @transform_1(%arg0: i32, %arg1: i32) -> (i32, i32, i32) {
    %c0_i32 = arith.constant 0 : i32
    %c0_i32_0 = arith.constant 0 : i32
    return %arg0, %arg1, %c0_i32 : i32, i32, i32
  }
  func.func @transform_2(%arg0: i32, %arg1: i32) -> (i32, i32) {
    %c0_i32 = arith.constant 0 : i32
    %c0_i32_0 = arith.constant 0 : i32
    %c0_i32_1 = arith.constant 0 : i32
    return %c0_i32, %c0_i32_0 : i32, i32
  }
  func.func @transform_3(%arg0: i32, %arg1: i32) -> (i32, i32) {
    %c0_i32 = arith.constant 0 : i32
    %c0_i32_0 = arith.constant 0 : i32
    %c0_i32_1 = arith.constant 0 : i32
    return %c0_i32, %c0_i32_0 : i32, i32
  }
  func.func @transform_4(%arg0: i32, %arg1: i32) -> (i32, i32, i32) {
    %c0_i32 = arith.constant 0 : i32
    %c0_i32_0 = arith.constant 0 : i32
    return %arg0, %arg1, %c0_i32 : i32, i32, i32
  }
}

</mosaic_0001>

<llo_original>
// kernel: tpu_custom_call.1
$region0: #{tpu_custom_call.1}
  #allocation0 [shape = 'u32[]', space=smem, size = 0x4, offset = 0x4, fixed_abs, tag = 'smem constant byte address 0x4 - core index']
  #allocation1 [shape = 'u32[72,128]{1,0:T(1,128)}', space=vmem, size = 0x9000, scoped, tag = 'internal scratch']
  %s0 = inlined_call_operand.hbm [shape: bf16[2,16,240], index: 0, kind: input, shape index: {}]
  %s1 = inlined_call_operand.hbm [shape: bf16[2,16,240], index: 1, kind: input, shape index: {}]
  %s2 = inlined_call_operand.hbm [shape: bf16[240,512], index: 2, kind: input, shape index: {}]
  %s3 = inlined_call_operand.hbm [shape: bf16[240,512], index: 3, kind: input, shape index: {}]
  %s4 = inlined_call_operand.hbm [shape: f32[2,16,512], index: 4, kind: output, shape index: {}]
  %s5 = sld [smem:[#allocation0]]
  $region65: #{tpu_custom_call.1} parent=0
    _
  %s7 = ssub.s32 1, %s5
  %s8 = scalar_select 0, %s7, %s5
  $region1: #{tpu_custom_call.1} parent=0
    #allocation2 [shape = 'u8[16384]{0}', space=vmem, size = 0x4000, scoped, tag = 'input window, operand 0']
    #allocation3 [shape = 's32[2]{0}', space=sflag, size = 0x8, scoped, tag = 'scoped memory for tpu_custom_call.1']
    #allocation4 [shape = 's32[2]{0}', space=sflag, size = 0x8, scoped, tag = 'scoped memory for tpu_custom_call.1']
    #allocation5 [shape = 'u8[16384]{0}', space=vmem, size = 0x4000, scoped, tag = 'input window, operand 1']
    #allocation6 [shape = 's32[2]{0}', space=sflag, size = 0x8, scoped, tag = 'scoped memory for tpu_custom_call.1']
    #allocation7 [shape = 'u8[245760]{0}', space=vmem, size = 0x3c000, scoped, tag = 'input window, operand 2, single buffered']
    #allocation8 [shape = 'u8[245760]{0}', space=vmem, size = 0x3c000, scoped, tag = 'input window, operand 3, single buffered']
    #allocation9 [shape = 's32[1]{0}', space=sflag, size = 0x4, scoped, tag = 'scoped memory for tpu_custom_call.1']
    #allocation10 [shape = 'u8[65536]{0}', space=vmem, size = 0x10000, scoped, tag = 'output window, operand 0']
    %9 = vsyncpa [#allocation3], 0
    %s10 = scalar_lea.sflag [#allocation3], 1
    %11 = vsyncpa %s10, 0
    %12 = vsyncpa [#allocation6], 0
    %s13 = scalar_lea.sflag [#allocation6], 1
    %14 = vsyncpa %s13, 0
    %15 = vsyncpa [#allocation9], 0
    %16 = vsyncpa [#allocation4], 0
    %s17 = scalar_lea.sflag [#allocation4], 1
    %18 = vsyncpa %s17, 0
    loop: start=0, step=1, limit=4
    $region2: #{tpu_custom_call.1} parent=1 // loop_pre_header
      _
    $region3: #{tpu_custom_call.1} parent=1 // loop_header
      %s20 = sphi 0, %s24
      %p21 = scmp.ge.s32.totalorder %s20, 4
      %s27 = sphi 0, %s39
      %s28 = sphi 0, %s35
      %s29 = sphi 0, %s27
      %s30 = sphi 0, %s28
      %s31 = sphi 0, %s29
      %s32 = sphi 0, %s30
      %s44 = sphi 0, %s46
      %s47 = sphi 0, %s44
      %s48 = sphi 0, %s47
      %s64 = sphi 0, %s48
      %s72 = sphi 0, %s74
      %s75 = sphi 0, %s72
      %s76 = sphi 0, %s75
      %s92 = sphi 0, %s76
      %s96 = sphi 0, %s96
      %s98 = sphi 0, %s96
      %s99 = sphi 0, %s98
      %s113 = sphi 0, %s99
      %s117 = sphi 0, %s117
      %s119 = sphi 0, %s117
      %s120 = sphi 0, %s119
      %s134 = sphi 0, %s120
      %s142 = sphi 0, %s144
      %s145 = sphi 0, %s142
      %s146 = sphi 0, %s145
      %s162 = sphi 0, %s146
    $region4: #{tpu_custom_call.1} parent=1 // loop_header_branch
      %23 = sbr.rel (%p21) target = $region8
    $region5: #{tpu_custom_call.1} parent=1 // loop_body
      %s25 = ssub.s32 %s20, 1
      %s26 = ssub.s32 %s20, 2
      %s33 = sadd.s32 1, %s28
      %p34 = scmp.ge.s32.totalorder %s33, 1
      %s35 = scalar_select %p34, 0, %s33
      %s36 = sadd.s32 1, %s27
      %s37 = scalar_select %p34, %s36, %s27
      %p38 = scmp.ge.s32.totalorder %s37, 2
      %s39 = scalar_select %p38, 0, %s37
      %s40 = ssub.s32 %s27, %s39
      %s41 = ssub.s32 %s28, %s35
      %s42 = sor.u32 %s40, %s41
      %p43 = scmp.eq.s32.totalorder %s42, 0
      %s45 = sadd.s32 %s44, 1
      %s46 = scalar_select %p43, %s44, %s45
      %p49 = pneg %p43
      %p50 = scmp.eq.s32.totalorder %s20, 1
      %p51 = por %p49, %p50
      %p52 = scmp.ne.s32.totalorder %s44, %s47
      %p53 = scmp.eq.s32.totalorder %s20, 0
      %p54 = por %p52, %p53
      %p55 = scmp.ne.s32.totalorder %s44, %s47
      %p56 = scmp.eq.s32.totalorder %s25, 1
      %p57 = por %p55, %p56
      %p58 = scmp.ne.s32.totalorder %s47, %s48
      %p59 = scmp.eq.s32.totalorder %s25, 0
      %p60 = por %p58, %p59
      %p61 = scmp.ne.s32.totalorder %s47, %s48
      %p62 = scmp.eq.s32.totalorder %s26, 1
      %p63 = por %p61, %p62
      %p65 = scmp.ne.s32.totalorder %s48, %s64
      %p66 = scmp.eq.s32.totalorder %s26, 0
      %p67 = por %p65, %p66
      %s68 = ssub.s32 %s27, %s39
      %s69 = ssub.s32 %s28, %s35
      %s70 = sor.u32 %s68, %s69
      %p71 = scmp.eq.s32.totalorder %s70, 0
      %s73 = sadd.s32 %s72, 1
      %s74 = scalar_select %p71, %s72, %s73
      %p77 = pneg %p71
      %p78 = scmp.eq.s32.totalorder %s20, 1
      %p79 = por %p77, %p78
      %p80 = scmp.ne.s32.totalorder %s72, %s75
      %p81 = scmp.eq.s32.totalorder %s20, 0
      %p82 = por %p80, %p81
      %p83 = scmp.ne.s32.totalorder %s72, %s75
      %p84 = scmp.eq.s32.totalorder %s25, 1
      %p85 = por %p83, %p84
      %p86 = scmp.ne.s32.totalorder %s75, %s76
      %p87 = scmp.eq.s32.totalorder %s25, 0
      %p88 = por %p86, %p87
      %p89 = scmp.ne.s32.totalorder %s75, %s76
      %p90 = scmp.eq.s32.totalorder %s26, 1
      %p91 = por %p89, %p90
      %p93 = scmp.ne.s32.totalorder %s76, %s92
      %p94 = scmp.eq.s32.totalorder %s26, 0
      %p95 = por %p93, %p94
      %s97 = sadd.s32 %s96, 1
      %p100 = scmp.eq.s32.totalorder %s20, 1
      %p101 = scmp.ne.s32.totalorder %s96, %s98
      %p102 = scmp.eq.s32.totalorder %s20, 0
      %p103 = por %p101, %p102
      %p104 = scmp.ne.s32.totalorder %s96, %s98
      %p105 = scmp.eq.s32.totalorder %s25, 1
      %p106 = por %p104, %p105
      %p107 = scmp.ne.s32.totalorder %s98, %s99
      %p108 = scmp.eq.s32.totalorder %s25, 0
      %p109 = por %p107, %p108
      %p110 = scmp.ne.s32.totalorder %s98, %s99
      %p111 = scmp.eq.s32.totalorder %s26, 1
      %p112 = por %p110, %p111
      %p114 = scmp.ne.s32.totalorder %s99, %s113
      %p115 = scmp.eq.s32.totalorder %s26, 0
      %p116 = por %p114, %p115
      %s118 = sadd.s32 %s117, 1
      %p121 = scmp.eq.s32.totalorder %s20, 1
      %p122 = scmp.ne.s32.totalorder %s117, %s119
      %p123 = scmp.eq.s32.totalorder %s20, 0
      %p124 = por %p122, %p123
      %p125 = scmp.ne.s32.totalorder %s117, %s119
      %p126 = scmp.eq.s32.totalorder %s25, 1
      %p127 = por %p125, %p126
      %p128 = scmp.ne.s32.totalorder %s119, %s120
      %p129 = scmp.eq.s32.totalorder %s25, 0
      %p130 = por %p128, %p129
      %p131 = scmp.ne.s32.totalorder %s119, %s120
      %p132 = scmp.eq.s32.totalorder %s26, 1
      %p133 = por %p131, %p132
      %p135 = scmp.ne.s32.totalorder %s120, %s134
      %p136 = scmp.eq.s32.totalorder %s26, 0
      %p137 = por %p135, %p136
      %s138 = ssub.s32 %s27, %s39
      %s139 = ssub.s32 %s28, %s35
      %s140 = sor.u32 %s138, %s139
      %p141 = scmp.eq.s32.totalorder %s140, 0
      %s143 = sadd.s32 %s142, 1
      %s144 = scalar_select %p141, %s142, %s143
      %p147 = pneg %p141
      %p148 = scmp.eq.s32.totalorder %s20, 1
      %p149 = por %p147, %p148
      %p150 = scmp.ne.s32.totalorder %s142, %s145
      %p151 = scmp.eq.s32.totalorder %s20, 0
      %p152 = por %p150, %p151
      %p153 = scmp.ne.s32.totalorder %s142, %s145
      %p154 = scmp.eq.s32.totalorder %s25, 1
      %p155 = por %p153, %p154
      %p156 = scmp.ne.s32.totalorder %s145, %s146
      %p157 = scmp.eq.s32.totalorder %s25, 0
      %p158 = por %p156, %p157
      %p159 = scmp.ne.s32.totalorder %s145, %s146
      %p160 = scmp.eq.s32.totalorder %s26, 1
      %p161 = por %p159, %p160
      %p163 = scmp.ne.s32.totalorder %s146, %s162
      %p164 = scmp.eq.s32.totalorder %s26, 0
      %p165 = por %p163, %p164
      %p166 = scmp.le.s32.totalorder 1, %s20
      %p167 = scmp.lt.s32.totalorder %s20, 3
      %p168 = pnand %p166, %p167
      %p169 = pneg %p168
      // Predicated region
      $region9: #{tpu_custom_call.1} parent=5 // pred_check
        _
      $region10: #{tpu_custom_call.1} parent=5 // pred_check_branch
        %171 = sbr.rel (%p168) target = $region12
      $region11: #{tpu_custom_call.1} parent=5 // pred_region
        %s172 = ssub.s32 %s20, 1
        // Predicated region
        $region13: #{tpu_custom_call.1} parent=11 // pred_check
          %p173 = pneg %p109
        $region14: #{tpu_custom_call.1} parent=11 // pred_check_branch
          %175 = sbr.rel (%p173) target = $region16
        $region15: #{tpu_custom_call.1} parent=11 // pred_region
          %177 = vsyncadd [#allocation6], 0
          %s178 = sshll.u32 %s2, 4
          %s179 = int_to_ptr.hbm [resolvable:$true] %s178
          %s180 = sshll.u32 [#allocation7], 4
          %s181 = int_to_ptr.vmem [resolvable:$true] %s180
          %186 = dma.hbm_to_vmem [thread:$0]  %s179, 7680, %s181, [#allocation6], 256, 256, 16
        $region16: #{tpu_custom_call.1} parent=11 // pred_fallthru
          _
        // Predicated region
        $region17: #{tpu_custom_call.1} parent=11 // pred_check
          %p187 = pneg %p130
        $region18: #{tpu_custom_call.1} parent=11 // pred_check_branch
          %189 = sbr.rel (%p187) target = $region20
        $region19: #{tpu_custom_call.1} parent=11 // pred_region
          %191 = vsyncadd [#allocation9], 0
          %s192 = sshll.u32 %s3, 4
          %s193 = int_to_ptr.hbm [resolvable:$true] %s192
          %s194 = sshll.u32 [#allocation8], 4
          %s195 = int_to_ptr.vmem [resolvable:$true] %s194
          %200 = dma.hbm_to_vmem [thread:$0]  %s193, 7680, %s195, [#allocation9], 256, 256, 16
        $region20: #{tpu_custom_call.1} parent=11 // pred_fallthru
          _
      $region12: #{tpu_custom_call.1} parent=5 // pred_fallthru
        _
      %p201 = scmp.lt.s32.totalorder %s20, 2
      // Predicated region
      $region21: #{tpu_custom_call.1} parent=5 // pred_check
        %p202 = pneg %p201
      $region22: #{tpu_custom_call.1} parent=5 // pred_check_branch
        %204 = sbr.rel (%p202) target = $region24
      $region23: #{tpu_custom_call.1} parent=5 // pred_region
        // Predicated region
        $region25: #{tpu_custom_call.1} parent=23 // pred_check
          %p205 = pneg %p54
        $region26: #{tpu_custom_call.1} parent=23 // pred_check_branch
          %207 = sbr.rel (%p205) target = $region28
        $region27: #{tpu_custom_call.1} parent=23 // pred_region
          %s208 = sand.u32 %s44, 1
          %s209 = scalar_lea.sflag [#allocation3], %s208
          %s210 = sand.u32 %s44, 1
          %s211 = smul.addr %s210, 16
          %s212 = scalar_lea.vmem [#allocation2], %s211
          %s213 = smul.u32 2, %s28
          %215 = vsyncadd %s209, 0
          %s216 = smul.addr %s213, 2
          %s217 = smul.addr %s27, 4
          %s218 = sadd.s32 %s216, %s217
          %s219 = smul.addr %s218, 4
          %s220 = scalar_lea.hbm %s0, %s219
          %s221 = sshll.u32 %s220, 4
          %s222 = int_to_ptr.hbm [resolvable:$true] %s221
          %s223 = sshll.u32 %s212, 4
          %s224 = int_to_ptr.vmem [resolvable:$true] %s223
          %229 = dma.hbm_to_vmem [thread:$0]  %s222, 256, %s224, %s209, 128, 128, 8
        $region28: #{tpu_custom_call.1} parent=23 // pred_fallthru
          _
        // Predicated region
        $region29: #{tpu_custom_call.1} parent=23 // pred_check
          %p230 = pneg %p82
        $region30: #{tpu_custom_call.1} parent=23 // pred_check_branch
          %232 = sbr.rel (%p230) target = $region32
        $region31: #{tpu_custom_call.1} parent=23 // pred_region
          %s233 = sand.u32 %s20, 1
          %s234 = scalar_lea.sflag [#allocation6], %s233
          %s235 = sand.u32 %s72, 1
          %s236 = smul.addr %s235, 16
          %s237 = scalar_lea.vmem [#allocation5], %s236
          %s238 = smul.u32 2, %s28
          %240 = vsyncadd %s234, 0
          %s241 = smul.addr %s238, 2
          %s242 = smul.addr %s27, 4
          %s243 = sadd.s32 %s241, %s242
          %s244 = smul.addr %s243, 4
          %s245 = scalar_lea.hbm %s1, %s244
          %s246 = sshll.u32 %s245, 4
          %s247 = int_to_ptr.hbm [resolvable:$true] %s246
          %s248 = sshll.u32 %s237, 4
          %s249 = int_to_ptr.vmem [resolvable:$true] %s248
          %254 = dma.hbm_to_vmem [thread:$0]  %s247, 256, %s249, %s234, 128, 128, 8
        $region32: #{tpu_custom_call.1} parent=23 // pred_fallthru
          _
      $region24: #{tpu_custom_call.1} parent=5 // pred_fallthru
        _
      %p255 = scmp.le.s32.totalorder 1, %s20
      %p256 = scmp.lt.s32.totalorder %s20, 3
      %p257 = pnand %p255, %p256
      %p258 = pneg %p257
      // Predicated region
      $region33: #{tpu_custom_call.1} parent=5 // pred_check
        _
      $region34: #{tpu_custom_call.1} parent=5 // pred_check_branch
        %260 = sbr.rel (%p257) target = $region36
      $region35: #{tpu_custom_call.1} parent=5 // pred_region
        %s261 = ssub.s32 %s20, 1
        %s262 = sand.u32 %s47, 1
        %s263 = scalar_lea.sflag [#allocation3], %s262
        %s264 = sand.u32 %s47, 1
        %s265 = smul.addr %s264, 16
        %s266 = scalar_lea.vmem [#allocation2], %s265
        // Predicated region
        $region37: #{tpu_custom_call.1} parent=35 // pred_check
          %p267 = pneg %p60
        $region38: #{tpu_custom_call.1} parent=35 // pred_check_branch
          %269 = sbr.rel (%p267) target = $region40
        $region39: #{tpu_custom_call.1} parent=35 // pred_region
          %271 = dma.done %s263, 256
        $region40: #{tpu_custom_call.1} parent=35 // pred_fallthru
          _
        %s272 = sand.u32 %s25, 1
        %s273 = scalar_lea.sflag [#allocation6], %s272
        %s274 = sand.u32 %s75, 1
        %s275 = smul.addr %s274, 16
        %s276 = scalar_lea.vmem [#allocation5], %s275
        // Predicated region
        $region41: #{tpu_custom_call.1} parent=35 // pred_check
          %p277 = pneg %p88
        $region42: #{tpu_custom_call.1} parent=35 // pred_check_branch
          %279 = sbr.rel (%p277) target = $region44
        $region43: #{tpu_custom_call.1} parent=35 // pred_region
          %281 = dma.done %s273, 256
        $region44: #{tpu_custom_call.1} parent=35 // pred_fallthru
          _
        // Predicated region
        $region45: #{tpu_custom_call.1} parent=35 // pred_check
          %p282 = pneg %p109
        $region46: #{tpu_custom_call.1} parent=35 // pred_check_branch
          %284 = sbr.rel (%p282) target = $region48
        $region47: #{tpu_custom_call.1} parent=35 // pred_region
          %286 = dma.done [#allocation6], 7680
        $region48: #{tpu_custom_call.1} parent=35 // pred_fallthru
          _
        // Predicated region
        $region49: #{tpu_custom_call.1} parent=35 // pred_check
          %p287 = pneg %p130
        $region50: #{tpu_custom_call.1} parent=35 // pred_check_branch
          %289 = sbr.rel (%p287) target = $region52
        $region51: #{tpu_custom_call.1} parent=35 // pred_region
          %291 = dma.done [#allocation9], 7680
        $region52: #{tpu_custom_call.1} parent=35 // pred_fallthru
          _
        %s292 = sand.u32 %s47, 1
        %s293 = scalar_lea.sflag [#allocation3], %s292
        %s294 = sand.u32 %s47, 1
        %s295 = smul.addr %s294, 16
        %s296 = scalar_lea.vmem [#allocation2], %s295
        %p297 = pneg %p60
        %p298 = pneg %p57
        %s299 = sand.u32 %s25, 1
        %s300 = scalar_lea.sflag [#allocation6], %s299
        %s301 = sand.u32 %s75, 1
        %s302 = smul.addr %s301, 16
        %s303 = scalar_lea.vmem [#allocation5], %s302
        %p304 = pneg %p88
        %p305 = pneg %p85
        %p306 = pneg %p109
        %p307 = pneg %p106
        %p308 = pneg %p130
        %p309 = pneg %p127
        %p310 = pneg %p158
        %p311 = pneg %p155
        %s312 = sand.u32 %s145, 1
        %s313 = scalar_lea.sflag [#allocation4], %s312
        %s314 = sand.u32 %s145, 1
        %s315 = smul.addr %s314, 64
        %s316 = scalar_lea.vmem [#allocation10], %s315
        %s317 = smul.u32 2, %s30
        %s318 = smul.u32 2, %s30
        %s319 = smul.u32 2, %s30
        %v321 = vld [vmem:[%s266] sm:$0xff]
        %v322 = vld [vmem:[%s266 + $0x8] sm:$0xff]
        %v323 = vld [vmem:[#allocation7] sm:$0xff]
        %v324 = vld [vmem:[#allocation7 + $0x8] sm:$0xff]
        %v325 = vld [vmem:[#allocation7 + $0x10] sm:$0xff]
        %v326 = vld [vmem:[#allocation7 + $0x18] sm:$0xff]
        %v327 = vld [vmem:[#allocation7 + $0x20] sm:$0xff]
        %v328 = vld [vmem:[#allocation7 + $0x28] sm:$0xff]
        %v329 = vld [vmem:[#allocation7 + $0x30] sm:$0xff]
        %v330 = vld [vmem:[#allocation7 + $0x38] sm:$0xff]
        %v331 = vld [vmem:[#allocation7 + $0x40] sm:$0xff]
        %v332 = vld [vmem:[#allocation7 + $0x48] sm:$0xff]
        %v333 = vld [vmem:[#allocation7 + $0x50] sm:$0xff]
        %v334 = vld [vmem:[#allocation7 + $0x58] sm:$0xff]
        %v335 = vld [vmem:[#allocation7 + $0x60] sm:$0xff]
        %v336 = vld [vmem:[#allocation7 + $0x68] sm:$0xff]
        %v337 = vld [vmem:[#allocation7 + $0x70] sm:$0xff]
        %v338 = vld [vmem:[#allocation7 + $0x78] sm:$0xff]
        %v339 = vld [vmem:[#allocation7 + $0x80] sm:$0xff]
        %v340 = vld [vmem:[#allocation7 + $0x88] sm:$0xff]
        %v341 = vld [vmem:[#allocation7 + $0x90] sm:$0xff]
        %v342 = vld [vmem:[#allocation7 + $0x98] sm:$0xff]
        %v343 = vld [vmem:[#allocation7 + $0xa0] sm:$0xff]
        %v344 = vld [vmem:[#allocation7 + $0xa8] sm:$0xff]
        %v345 = vld [vmem:[#allocation7 + $0xb0] sm:$0xff]
        %v346 = vld [vmem:[#allocation7 + $0xb8] sm:$0xff]
        %v347 = vld [vmem:[#allocation7 + $0xc0] sm:$0xff]
        %v348 = vld [vmem:[#allocation7 + $0xc8] sm:$0xff]
        %v349 = vld [vmem:[#allocation7 + $0xd0] sm:$0xff]
        %v350 = vld [vmem:[#allocation7 + $0xd8] sm:$0xff]
        %v351 = vld [vmem:[#allocation7 + $0xe0] sm:$0xff]
        %v352 = vld [vmem:[#allocation7 + $0xe8] sm:$0xff]
        %v353 = vld [vmem:[#allocation7 + $0xf0] sm:$0xff]
        %v354 = vld [vmem:[#allocation7 + $0xf8] sm:$0xff]
        %v355 = vld [vmem:[#allocation7 + $0x100] sm:$0xff]
        %v356 = vld [vmem:[#allocation7 + $0x108] sm:$0xff]
        %v357 = vld [vmem:[#allocation7 + $0x110] sm:$0xff]
        %v358 = vld [vmem:[#allocation7 + $0x118] sm:$0xff]
        %v359 = vld [vmem:[#allocation7 + $0x120] sm:$0xff]
        %v360 = vld [vmem:[#allocation7 + $0x128] sm:$0xff]
        %v361 = vld [vmem:[#allocation7 + $0x130] sm:$0xff]
        %v362 = vld [vmem:[#allocation7 + $0x138] sm:$0xff]
        %v363 = vld [vmem:[#allocation7 + $0x140] sm:$0xff]
        %v364 = vld [vmem:[#allocation7 + $0x148] sm:$0xff]
        %v365 = vld [vmem:[#allocation7 + $0x150] sm:$0xff]
        %v366 = vld [vmem:[#allocation7 + $0x158] sm:$0xff]
        %v367 = vld [vmem:[#allocation7 + $0x160] sm:$0xff]
        %v368 = vld [vmem:[#allocation7 + $0x168] sm:$0xff]
        %v369 = vld [vmem:[#allocation7 + $0x170] sm:$0xff]
        %v370 = vld [vmem:[#allocation7 + $0x178] sm:$0xff]
        %v371 = vld [vmem:[#allocation7 + $0x180] sm:$0xff]
        %v372 = vld [vmem:[#allocation7 + $0x188] sm:$0xff]
        %v373 = vld [vmem:[#allocation7 + $0x190] sm:$0xff]
        %v374 = vld [vmem:[#allocation7 + $0x198] sm:$0xff]
        %v375 = vld [vmem:[#allocation7 + $0x1a0] sm:$0xff]
        %v376 = vld [vmem:[#allocation7 + $0x1a8] sm:$0xff]
        %v377 = vld [vmem:[#allocation7 + $0x1b0] sm:$0xff]
        %v378 = vld [vmem:[#allocation7 + $0x1b8] sm:$0xff]
        %v379 = vld [vmem:[#allocation7 + $0x1c0] sm:$0xff]
        %v380 = vld [vmem:[#allocation7 + $0x1c8] sm:$0xff]
        %v381 = vld [vmem:[#allocation7 + $0x1d0] sm:$0xff]
        %v382 = vld [vmem:[#allocation7 + $0x1d8] sm:$0xff]
        %v383 = vld [vmem:[%s276] sm:$0xff]
        %v384 = vld [vmem:[%s276 + $0x8] sm:$0xff]
        %v385 = vld [vmem:[#allocation8] sm:$0xff]
        %v386 = vld [vmem:[#allocation8 + $0x8] sm:$0xff]
        %v387 = vld [vmem:[#allocation8 + $0x10] sm:$0xff]
        %v388 = vld [vmem:[#allocation8 + $0x18] sm:$0xff]
        %v389 = vld [vmem:[#allocation8 + $0x20] sm:$0xff]
        %v390 = vld [vmem:[#allocation8 + $0x28] sm:$0xff]
        %v391 = vld [vmem:[#allocation8 + $0x30] sm:$0xff]
        %v392 = vld [vmem:[#allocation8 + $0x38] sm:$0xff]
        %v393 = vld [vmem:[#allocation8 + $0x40] sm:$0xff]
        %v394 = vld [vmem:[#allocation8 + $0x48] sm:$0xff]
        %v395 = vld [vmem:[#allocation8 + $0x50] sm:$0xff]
        %v396 = vld [vmem:[#allocation8 + $0x58] sm:$0xff]
        %v397 = vld [vmem:[#allocation8 + $0x60] sm:$0xff]
        %v398 = vld [vmem:[#allocation8 + $0x68] sm:$0xff]
        %v399 = vld [vmem:[#allocation8 + $0x70] sm:$0xff]
        %v400 = vld [vmem:[#allocation8 + $0x78] sm:$0xff]
        %v401 = vld [vmem:[#allocation8 + $0x80] sm:$0xff]
        %v402 = vld [vmem:[#allocation8 + $0x88] sm:$0xff]
        %v403 = vld [vmem:[#allocation8 + $0x90] sm:$0xff]
        %v404 = vld [vmem:[#allocation8 + $0x98] sm:$0xff]
        %v405 = vld [vmem:[#allocation8 + $0xa0] sm:$0xff]
        %v406 = vld [vmem:[#allocation8 + $0xa8] sm:$0xff]
        %v407 = vld [vmem:[#allocation8 + $0xb0] sm:$0xff]
        %v408 = vld [vmem:[#allocation8 + $0xb8] sm:$0xff]
        %v409 = vld [vmem:[#allocation8 + $0xc0] sm:$0xff]
        %v410 = vld [vmem:[#allocation8 + $0xc8] sm:$0xff]
        %v411 = vld [vmem:[#allocation8 + $0xd0] sm:$0xff]
        %v412 = vld [vmem:[#allocation8 + $0xd8] sm:$0xff]
        %v413 = vld [vmem:[#allocation8 + $0xe0] sm:$0xff]
        %v414 = vld [vmem:[#allocation8 + $0xe8] sm:$0xff]
        %v415 = vld [vmem:[#allocation8 + $0xf0] sm:$0xff]
        %v416 = vld [vmem:[#allocation8 + $0xf8] sm:$0xff]
        %v417 = vld [vmem:[#allocation8 + $0x100] sm:$0xff]
        %v418 = vld [vmem:[#allocation8 + $0x108] sm:$0xff]
        %v419 = vld [vmem:[#allocation8 + $0x110] sm:$0xff]
        %v420 = vld [vmem:[#allocation8 + $0x118] sm:$0xff]
        %v421 = vld [vmem:[#allocation8 + $0x120] sm:$0xff]
        %v422 = vld [vmem:[#allocation8 + $0x128] sm:$0xff]
        %v423 = vld [vmem:[#allocation8 + $0x130] sm:$0xff]
        %v424 = vld [vmem:[#allocation8 + $0x138] sm:$0xff]
        %v425 = vld [vmem:[#allocation8 + $0x140] sm:$0xff]
        %v426 = vld [vmem:[#allocation8 + $0x148] sm:$0xff]
        %v427 = vld [vmem:[#allocation8 + $0x150] sm:$0xff]
        %v428 = vld [vmem:[#allocation8 + $0x158] sm:$0xff]
        %v429 = vld [vmem:[#allocation8 + $0x160] sm:$0xff]
        %v430 = vld [vmem:[#allocation8 + $0x168] sm:$0xff]
        %v431 = vld [vmem:[#allocation8 + $0x170] sm:$0xff]
        %v432 = vld [vmem:[#allocation8 + $0x178] sm:$0xff]
        %v433 = vld [vmem:[#allocation8 + $0x180] sm:$0xff]
        %v434 = vld [vmem:[#allocation8 + $0x188] sm:$0xff]
        %v435 = vld [vmem:[#allocation8 + $0x190] sm:$0xff]
        %v436 = vld [vmem:[#allocation8 + $0x198] sm:$0xff]
        %v437 = vld [vmem:[#allocation8 + $0x1a0] sm:$0xff]
        %v438 = vld [vmem:[#allocation8 + $0x1a8] sm:$0xff]
        %v439 = vld [vmem:[#allocation8 + $0x1b0] sm:$0xff]
        %v440 = vld [vmem:[#allocation8 + $0x1b8] sm:$0xff]
        %v441 = vld [vmem:[#allocation8 + $0x1c0] sm:$0xff]
        %v442 = vld [vmem:[#allocation8 + $0x1c8] sm:$0xff]
        %v443 = vld [vmem:[#allocation8 + $0x1d0] sm:$0xff]
        %v444 = vld [vmem:[#allocation8 + $0x1d8] sm:$0xff]
        %v447 = vunpack.c.l.b16 %v383
        %v448 = vunpack.c.h.b16 %v383
        %v449 = vunpack.c.l.b16 %v384
        %v450 = vunpack.c.h.b16 %v384
        %v451 = vpack.c.b16 %v449, %v447
        %v452 = vpack.c.b16 %v450, %v448
        %v514 = vunpack.c.l.b16 %v385
        %v515 = vunpack.c.h.b16 %v385
        %v516 = vunpack.c.l.b16 %v386
        %v517 = vunpack.c.h.b16 %v386
        %v518 = vunpack.c.l.b16 %v387
        %v519 = vunpack.c.h.b16 %v387
        %v520 = vunpack.c.l.b16 %v388
        %v521 = vunpack.c.h.b16 %v388
        %v522 = vunpack.c.l.b16 %v389
        %v523 = vunpack.c.h.b16 %v389
        %v524 = vunpack.c.l.b16 %v390
        %v525 = vunpack.c.h.b16 %v390
        %v526 = vunpack.c.l.b16 %v391
        %v527 = vunpack.c.h.b16 %v391
        %v528 = vunpack.c.l.b16 %v392
        %v529 = vunpack.c.h.b16 %v392
        %v530 = vunpack.c.l.b16 %v393
        %v531 = vunpack.c.h.b16 %v393
        %v532 = vunpack.c.l.b16 %v394
        %v533 = vunpack.c.h.b16 %v394
        %v534 = vunpack.c.l.b16 %v395
        %v535 = vunpack.c.h.b16 %v395
        %v536 = vunpack.c.l.b16 %v396
        %v537 = vunpack.c.h.b16 %v396
        %v538 = vunpack.c.l.b16 %v397
        %v539 = vunpack.c.h.b16 %v397
        %v540 = vunpack.c.l.b16 %v398
        %v541 = vunpack.c.h.b16 %v398
        %v542 = vunpack.c.l.b16 %v399
        %v543 = vunpack.c.h.b16 %v399
        %v544 = vunpack.c.l.b16 %v400
        %v545 = vunpack.c.h.b16 %v400
        %v546 = vunpack.c.l.b16 %v401
        %v547 = vunpack.c.h.b16 %v401
        %v548 = vunpack.c.l.b16 %v402
        %v549 = vunpack.c.h.b16 %v402
        %v550 = vunpack.c.l.b16 %v403
        %v551 = vunpack.c.h.b16 %v403
        %v552 = vunpack.c.l.b16 %v404
        %v553 = vunpack.c.h.b16 %v404
        %v554 = vunpack.c.l.b16 %v405
        %v555 = vunpack.c.h.b16 %v405
        %v556 = vunpack.c.l.b16 %v406
        %v557 = vunpack.c.h.b16 %v406
        %v558 = vunpack.c.l.b16 %v407
        %v559 = vunpack.c.h.b16 %v407
        %v560 = vunpack.c.l.b16 %v408
        %v561 = vunpack.c.h.b16 %v408
        %v562 = vunpack.c.l.b16 %v409
        %v563 = vunpack.c.h.b16 %v409
        %v564 = vunpack.c.l.b16 %v410
        %v565 = vunpack.c.h.b16 %v410
        %v566 = vunpack.c.l.b16 %v411
        %v567 = vunpack.c.h.b16 %v411
        %v568 = vunpack.c.l.b16 %v412
        %v569 = vunpack.c.h.b16 %v412
        %v570 = vunpack.c.l.b16 %v413
        %v571 = vunpack.c.h.b16 %v413
        %v572 = vunpack.c.l.b16 %v414
        %v573 = vunpack.c.h.b16 %v414
        %v574 = vunpack.c.l.b16 %v415
        %v575 = vunpack.c.h.b16 %v415
        %v576 = vunpack.c.l.b16 %v416
        %v577 = vunpack.c.h.b16 %v416
        %v578 = vunpack.c.l.b16 %v417
        %v579 = vunpack.c.h.b16 %v417
        %v580 = vunpack.c.l.b16 %v418
        %v581 = vunpack.c.h.b16 %v418
        %v582 = vunpack.c.l.b16 %v419
        %v583 = vunpack.c.h.b16 %v419
        %v584 = vunpack.c.l.b16 %v420
        %v585 = vunpack.c.h.b16 %v420
        %v586 = vunpack.c.l.b16 %v421
        %v587 = vunpack.c.h.b16 %v421
        %v588 = vunpack.c.l.b16 %v422
        %v589 = vunpack.c.h.b16 %v422
        %v590 = vunpack.c.l.b16 %v423
        %v591 = vunpack.c.h.b16 %v423
        %v592 = vunpack.c.l.b16 %v424
        %v593 = vunpack.c.h.b16 %v424
        %v594 = vunpack.c.l.b16 %v425
        %v595 = vunpack.c.h.b16 %v425
        %v596 = vunpack.c.l.b16 %v426
        %v597 = vunpack.c.h.b16 %v426
        %v598 = vunpack.c.l.b16 %v427
        %v599 = vunpack.c.h.b16 %v427
        %v600 = vunpack.c.l.b16 %v428
        %v601 = vunpack.c.h.b16 %v428
        %v602 = vunpack.c.l.b16 %v429
        %v603 = vunpack.c.h.b16 %v429
        %v604 = vunpack.c.l.b16 %v430
        %v605 = vunpack.c.h.b16 %v430
        %v606 = vunpack.c.l.b16 %v431
        %v607 = vunpack.c.h.b16 %v431
        %v608 = vunpack.c.l.b16 %v432
        %v609 = vunpack.c.h.b16 %v432
        %v610 = vunpack.c.l.b16 %v433
        %v611 = vunpack.c.h.b16 %v433
        %v612 = vunpack.c.l.b16 %v434
        %v613 = vunpack.c.h.b16 %v434
        %v614 = vunpack.c.l.b16 %v435
        %v615 = vunpack.c.h.b16 %v435
        %v616 = vunpack.c.l.b16 %v436
        %v617 = vunpack.c.h.b16 %v436
        %v618 = vunpack.c.l.b16 %v437
        %v619 = vunpack.c.h.b16 %v437
        %v620 = vunpack.c.l.b16 %v438
        %v621 = vunpack.c.h.b16 %v438
        %v622 = vunpack.c.l.b16 %v439
        %v623 = vunpack.c.h.b16 %v439
        %v624 = vunpack.c.l.b16 %v440
        %v625 = vunpack.c.h.b16 %v440
        %v626 = vunpack.c.l.b16 %v441
        %v627 = vunpack.c.h.b16 %v441
        %v628 = vunpack.c.l.b16 %v442
        %v629 = vunpack.c.h.b16 %v442
        %v630 = vunpack.c.l.b16 %v443
        %v631 = vunpack.c.h.b16 %v443
        %v632 = vunpack.c.l.b16 %v444
        %v633 = vunpack.c.h.b16 %v444
        %v634 = vpack.c.b16 %v518, %v514
        %v635 = vpack.c.b16 %v519, %v515
        %v636 = vpack.c.b16 %v520, %v516
        %v637 = vpack.c.b16 %v521, %v517
        %v638 = vpack.c.b16 %v526, %v522
        %v639 = vpack.c.b16 %v527, %v523
        %v640 = vpack.c.b16 %v528, %v524
        %v641 = vpack.c.b16 %v529, %v525
        %v642 = vpack.c.b16 %v534, %v530
        %v643 = vpack.c.b16 %v535, %v531
        %v644 = vpack.c.b16 %v536, %v532
        %v645 = vpack.c.b16 %v537, %v533
        %v646 = vpack.c.b16 %v542, %v538
        %v647 = vpack.c.b16 %v543, %v539
        %v648 = vpack.c.b16 %v544, %v540
        %v649 = vpack.c.b16 %v545, %v541
        %v650 = vpack.c.b16 %v550, %v546
        %v651 = vpack.c.b16 %v551, %v547
        %v652 = vpack.c.b16 %v552, %v548
        %v653 = vpack.c.b16 %v553, %v549
        %v654 = vpack.c.b16 %v558, %v554
        %v655 = vpack.c.b16 %v559, %v555
        %v656 = vpack.c.b16 %v560, %v556
        %v657 = vpack.c.b16 %v561, %v557
        %v658 = vpack.c.b16 %v566, %v562
        %v659 = vpack.c.b16 %v567, %v563
        %v660 = vpack.c.b16 %v568, %v564
        %v661 = vpack.c.b16 %v569, %v565
        %v662 = vpack.c.b16 %v574, %v570
        %v663 = vpack.c.b16 %v575, %v571
        %v664 = vpack.c.b16 %v576, %v572
        %v665 = vpack.c.b16 %v577, %v573
        %v666 = vpack.c.b16 %v582, %v578
        %v667 = vpack.c.b16 %v583, %v579
        %v668 = vpack.c.b16 %v584, %v580
        %v669 = vpack.c.b16 %v585, %v581
        %v670 = vpack.c.b16 %v590, %v586
        %v671 = vpack.c.b16 %v591, %v587
        %v672 = vpack.c.b16 %v592, %v588
        %v673 = vpack.c.b16 %v593, %v589
        %v674 = vpack.c.b16 %v598, %v594
        %v675 = vpack.c.b16 %v599, %v595
        %v676 = vpack.c.b16 %v600, %v596
        %v677 = vpack.c.b16 %v601, %v597
        %v678 = vpack.c.b16 %v606, %v602
        %v679 = vpack.c.b16 %v607, %v603
        %v680 = vpack.c.b16 %v608, %v604
        %v681 = vpack.c.b16 %v609, %v605
        %v682 = vpack.c.b16 %v614, %v610
        %v683 = vpack.c.b16 %v615, %v611
        %v684 = vpack.c.b16 %v616, %v612
        %v685 = vpack.c.b16 %v617, %v613
        %v686 = vpack.c.b16 %v622, %v618
        %v687 = vpack.c.b16 %v623, %v619
        %v688 = vpack.c.b16 %v624, %v620
        %v689 = vpack.c.b16 %v625, %v621
        %v690 = vpack.c.b16 %v630, %v626
        %v691 = vpack.c.b16 %v631, %v627
        %v692 = vpack.c.b16 %v632, %v628
        %v693 = vpack.c.b16 %v633, %v629
        %vm754 = vcmask 916480
        %v756 = vsel %vm754, %v452, 0
        %758 = vmatpush.bf16.msra.mxu0 %v662
        %759 = vmatpush.bf16.msra.mxu0 %v658
        %760 = vmatpush.bf16.msra.mxu0 %v654
        %761 = vmatpush.bf16.msra.mxu0 %v650
        %762 = vmatpush.bf16.msra.mxu0 %v646
        %763 = vmatpush.bf16.msra.mxu0 %v642
        %764 = vmatpush.bf16.msra.mxu0 %v638
        %765 = vmatpush.bf16.msra.mxu0 %v634
        %766 = vmatmul.bf16.gmra.mxu0 %v451
        %v767 = vpop.f32.mrf.mxu0
        %v768 = vadd.f32 0.0, %v767
        %v769 = vpop.f32.mrf.mxu0
        %v770 = vadd.f32 0.0, %v769
        %771 = vdwg.mxu0
        %772 = vmatpush.bf16.msra.mxu0 0
        %773 = vmatpush.bf16.msra.mxu0 %v690
        %774 = vmatpush.bf16.msra.mxu0 %v686
        %775 = vmatpush.bf16.msra.mxu0 %v682
        %776 = vmatpush.bf16.msra.mxu0 %v678
        %777 = vmatpush.bf16.msra.mxu0 %v674
        %778 = vmatpush.bf16.msra.mxu0 %v670
        %779 = vmatpush.bf16.msra.mxu0 %v666
        %780 = vmatmul.bf16.gmra.mxu0 %v756
        %v781 = vpop.f32.mrf.mxu0
        %v782 = vadd.f32 %v768, %v781
        %v783 = vpop.f32.mrf.mxu0
        %v784 = vadd.f32 %v770, %v783
        %785 = vdwg.mxu0
        %786 = vmatpush.bf16.msra.mxu0 %v663
        %787 = vmatpush.bf16.msra.mxu0 %v659
        %788 = vmatpush.bf16.msra.mxu0 %v655
        %789 = vmatpush.bf16.msra.mxu0 %v651
        %790 = vmatpush.bf16.msra.mxu0 %v647
        %791 = vmatpush.bf16.msra.mxu0 %v643
        %792 = vmatpush.bf16.msra.mxu0 %v639
        %793 = vmatpush.bf16.msra.mxu0 %v635
        %794 = vmatmul.bf16.gmra.mxu0 %v451
        %v795 = vpop.f32.mrf.mxu0
        %v796 = vadd.f32 0.0, %v795
        %v797 = vpop.f32.mrf.mxu0
        %v798 = vadd.f32 0.0, %v797
        %799 = vdwg.mxu0
        %800 = vmatpush.bf16.msra.mxu0 0
        %801 = vmatpush.bf16.msra.mxu0 %v691
        %802 = vmatpush.bf16.msra.mxu0 %v687
        %803 = vmatpush.bf16.msra.mxu0 %v683
        %804 = vmatpush.bf16.msra.mxu0 %v679
        %805 = vmatpush.bf16.msra.mxu0 %v675
        %806 = vmatpush.bf16.msra.mxu0 %v671
        %807 = vmatpush.bf16.msra.mxu0 %v667
        %808 = vmatmul.bf16.gmra.mxu0 %v756
        %v809 = vpop.f32.mrf.mxu0
        %v810 = vadd.f32 %v796, %v809
        %v811 = vpop.f32.mrf.mxu0
        %v812 = vadd.f32 %v798, %v811
        %813 = vdwg.mxu0
        %814 = vmatpush.bf16.msra.mxu0 %v664
        %815 = vmatpush.bf16.msra.mxu0 %v660
        %816 = vmatpush.bf16.msra.mxu0 %v656
        %817 = vmatpush.bf16.msra.mxu0 %v652
        %818 = vmatpush.bf16.msra.mxu0 %v648
        %819 = vmatpush.bf16.msra.mxu0 %v644
        %820 = vmatpush.bf16.msra.mxu0 %v640
        %821 = vmatpush.bf16.msra.mxu0 %v636
        %822 = vmatmul.bf16.gmra.mxu0 %v451
        %v823 = vpop.f32.mrf.mxu0
        %v824 = vadd.f32 0.0, %v823
        %v825 = vpop.f32.mrf.mxu0
        %v826 = vadd.f32 0.0, %v825
        %827 = vdwg.mxu0
        %828 = vmatpush.bf16.msra.mxu0 0
        %829 = vmatpush.bf16.msra.mxu0 %v692
        %830 = vmatpush.bf16.msra.mxu0 %v688
        %831 = vmatpush.bf16.msra.mxu0 %v684
        %832 = vmatpush.bf16.msra.mxu0 %v680
        %833 = vmatpush.bf16.msra.mxu0 %v676
        %834 = vmatpush.bf16.msra.mxu0 %v672
        %835 = vmatpush.bf16.msra.mxu0 %v668
        %836 = vmatmul.bf16.gmra.mxu0 %v756
        %v837 = vpop.f32.mrf.mxu0
        %v838 = vadd.f32 %v824, %v837
        %v839 = vpop.f32.mrf.mxu0
        %v840 = vadd.f32 %v826, %v839
        %841 = vdwg.mxu0
        %842 = vmatpush.bf16.msra.mxu0 %v665
        %843 = vmatpush.bf16.msra.mxu0 %v661
        %844 = vmatpush.bf16.msra.mxu0 %v657
        %845 = vmatpush.bf16.msra.mxu0 %v653
        %846 = vmatpush.bf16.msra.mxu0 %v649
        %847 = vmatpush.bf16.msra.mxu0 %v645
        %848 = vmatpush.bf16.msra.mxu0 %v641
        %849 = vmatpush.bf16.msra.mxu0 %v637
        %850 = vmatmul.bf16.gmra.mxu0 %v451
        %v851 = vpop.f32.mrf.mxu0
        %v852 = vadd.f32 0.0, %v851
        %v853 = vpop.f32.mrf.mxu0
        %v854 = vadd.f32 0.0, %v853
        %855 = vdwg.mxu0
        %856 = vmatpush.bf16.msra.mxu0 0
        %857 = vmatpush.bf16.msra.mxu0 %v693
        %858 = vmatpush.bf16.msra.mxu0 %v689
        %859 = vmatpush.bf16.msra.mxu0 %v685
        %860 = vmatpush.bf16.msra.mxu0 %v681
        %861 = vmatpush.bf16.msra.mxu0 %v677
        %862 = vmatpush.bf16.msra.mxu0 %v673
        %863 = vmatpush.bf16.msra.mxu0 %v669
        %864 = vmatmul.bf16.gmra.mxu0 %v756
        %v865 = vpop.f32.mrf.mxu0
        %v866 = vadd.f32 %v852, %v865
        %v867 = vpop.f32.mrf.mxu0
        %v868 = vadd.f32 %v854, %v867
        %869 = vdwg.mxu0
        %v872 = vunpack.c.l.b16 %v321
        %v873 = vunpack.c.h.b16 %v321
        %v874 = vunpack.c.l.b16 %v322
        %v875 = vunpack.c.h.b16 %v322
        %v876 = vpack.c.b16 %v874, %v872
        %v877 = vpack.c.b16 %v875, %v873
        %v939 = vunpack.c.l.b16 %v323
        %v940 = vunpack.c.h.b16 %v323
        %v941 = vunpack.c.l.b16 %v324
        %v942 = vunpack.c.h.b16 %v324
        %v943 = vunpack.c.l.b16 %v325
        %v944 = vunpack.c.h.b16 %v325
        %v945 = vunpack.c.l.b16 %v326
        %v946 = vunpack.c.h.b16 %v326
        %v947 = vunpack.c.l.b16 %v327
        %v948 = vunpack.c.h.b16 %v327
        %v949 = vunpack.c.l.b16 %v328
        %v950 = vunpack.c.h.b16 %v328
        %v951 = vunpack.c.l.b16 %v329
        %v952 = vunpack.c.h.b16 %v329
        %v953 = vunpack.c.l.b16 %v330
        %v954 = vunpack.c.h.b16 %v330
        %v955 = vunpack.c.l.b16 %v331
        %v956 = vunpack.c.h.b16 %v331
        %v957 = vunpack.c.l.b16 %v332
        %v958 = vunpack.c.h.b16 %v332
        %v959 = vunpack.c.l.b16 %v333
        %v960 = vunpack.c.h.b16 %v333
        %v961 = vunpack.c.l.b16 %v334
        %v962 = vunpack.c.h.b16 %v334
        %v963 = vunpack.c.l.b16 %v335
        %v964 = vunpack.c.h.b16 %v335
        %v965 = vunpack.c.l.b16 %v336
        %v966 = vunpack.c.h.b16 %v336
        %v967 = vunpack.c.l.b16 %v337
        %v968 = vunpack.c.h.b16 %v337
        %v969 = vunpack.c.l.b16 %v338
        %v970 = vunpack.c.h.b16 %v338
        %v971 = vunpack.c.l.b16 %v339
        %v972 = vunpack.c.h.b16 %v339
        %v973 = vunpack.c.l.b16 %v340
        %v974 = vunpack.c.h.b16 %v340
        %v975 = vunpack.c.l.b16 %v341
        %v976 = vunpack.c.h.b16 %v341
        %v977 = vunpack.c.l.b16 %v342
        %v978 = vunpack.c.h.b16 %v342
        %v979 = vunpack.c.l.b16 %v343
        %v980 = vunpack.c.h.b16 %v343
        %v981 = vunpack.c.l.b16 %v344
        %v982 = vunpack.c.h.b16 %v344
        %v983 = vunpack.c.l.b16 %v345
        %v984 = vunpack.c.h.b16 %v345
        %v985 = vunpack.c.l.b16 %v346
        %v986 = vunpack.c.h.b16 %v346
        %v987 = vunpack.c.l.b16 %v347
        %v988 = vunpack.c.h.b16 %v347
        %v989 = vunpack.c.l.b16 %v348
        %v990 = vunpack.c.h.b16 %v348
        %v991 = vunpack.c.l.b16 %v349
        %v992 = vunpack.c.h.b16 %v349
        %v993 = vunpack.c.l.b16 %v350
        %v994 = vunpack.c.h.b16 %v350
        %v995 = vunpack.c.l.b16 %v351
        %v996 = vunpack.c.h.b16 %v351
        %v997 = vunpack.c.l.b16 %v352
        %v998 = vunpack.c.h.b16 %v352
        %v999 = vunpack.c.l.b16 %v353
        %v1000 = vunpack.c.h.b16 %v353
        %v1001 = vunpack.c.l.b16 %v354
        %v1002 = vunpack.c.h.b16 %v354
        %v1003 = vunpack.c.l.b16 %v355
        %v1004 = vunpack.c.h.b16 %v355
        %v1005 = vunpack.c.l.b16 %v356
        %v1006 = vunpack.c.h.b16 %v356
        %v1007 = vunpack.c.l.b16 %v357
        %v1008 = vunpack.c.h.b16 %v357
        %v1009 = vunpack.c.l.b16 %v358
        %v1010 = vunpack.c.h.b16 %v358
        %v1011 = vunpack.c.l.b16 %v359
        %v1012 = vunpack.c.h.b16 %v359
        %v1013 = vunpack.c.l.b16 %v360
        %v1014 = vunpack.c.h.b16 %v360
        %v1015 = vunpack.c.l.b16 %v361
        %v1016 = vunpack.c.h.b16 %v361
        %v1017 = vunpack.c.l.b16 %v362
        %v1018 = vunpack.c.h.b16 %v362
        %v1019 = vunpack.c.l.b16 %v363
        %v1020 = vunpack.c.h.b16 %v363
        %v1021 = vunpack.c.l.b16 %v364
        %v1022 = vunpack.c.h.b16 %v364
        %v1023 = vunpack.c.l.b16 %v365
        %v1024 = vunpack.c.h.b16 %v365
        %v1025 = vunpack.c.l.b16 %v366
        %v1026 = vunpack.c.h.b16 %v366
        %v1027 = vunpack.c.l.b16 %v367
        %v1028 = vunpack.c.h.b16 %v367
        %v1029 = vunpack.c.l.b16 %v368
        %v1030 = vunpack.c.h.b16 %v368
        %v1031 = vunpack.c.l.b16 %v369
        %v1032 = vunpack.c.h.b16 %v369
        %v1033 = vunpack.c.l.b16 %v370
        %v1034 = vunpack.c.h.b16 %v370
        %v1035 = vunpack.c.l.b16 %v371
        %v1036 = vunpack.c.h.b16 %v371
        %v1037 = vunpack.c.l.b16 %v372
        %v1038 = vunpack.c.h.b16 %v372
        %v1039 = vunpack.c.l.b16 %v373
        %v1040 = vunpack.c.h.b16 %v373
        %v1041 = vunpack.c.l.b16 %v374
        %v1042 = vunpack.c.h.b16 %v374
        %v1043 = vunpack.c.l.b16 %v375
        %v1044 = vunpack.c.h.b16 %v375
        %v1045 = vunpack.c.l.b16 %v376
        %v1046 = vunpack.c.h.b16 %v376
        %v1047 = vunpack.c.l.b16 %v377
        %v1048 = vunpack.c.h.b16 %v377
        %v1049 = vunpack.c.l.b16 %v378
        %v1050 = vunpack.c.h.b16 %v378
        %v1051 = vunpack.c.l.b16 %v379
        %v1052 = vunpack.c.h.b16 %v379
        %v1053 = vunpack.c.l.b16 %v380
        %v1054 = vunpack.c.h.b16 %v380
        %v1055 = vunpack.c.l.b16 %v381
        %v1056 = vunpack.c.h.b16 %v381
        %v1057 = vunpack.c.l.b16 %v382
        %v1058 = vunpack.c.h.b16 %v382
        %v1059 = vpack.c.b16 %v943, %v939
        %v1060 = vpack.c.b16 %v944, %v940
        %v1061 = vpack.c.b16 %v945, %v941
        %v1062 = vpack.c.b16 %v946, %v942
        %v1063 = vpack.c.b16 %v951, %v947
        %v1064 = vpack.c.b16 %v952, %v948
        %v1065 = vpack.c.b16 %v953, %v949
        %v1066 = vpack.c.b16 %v954, %v950
        %v1067 = vpack.c.b16 %v959, %v955
        %v1068 = vpack.c.b16 %v960, %v956
        %v1069 = vpack.c.b16 %v961, %v957
        %v1070 = vpack.c.b16 %v962, %v958
        %v1071 = vpack.c.b16 %v967, %v963
        %v1072 = vpack.c.b16 %v968, %v964
        %v1073 = vpack.c.b16 %v969, %v965
        %v1074 = vpack.c.b16 %v970, %v966
        %v1075 = vpack.c.b16 %v975, %v971
        %v1076 = vpack.c.b16 %v976, %v972
        %v1077 = vpack.c.b16 %v977, %v973
        %v1078 = vpack.c.b16 %v978, %v974
        %v1079 = vpack.c.b16 %v983, %v979
        %v1080 = vpack.c.b16 %v984, %v980
        %v1081 = vpack.c.b16 %v985, %v981
        %v1082 = vpack.c.b16 %v986, %v982
        %v1083 = vpack.c.b16 %v991, %v987
        %v1084 = vpack.c.b16 %v992, %v988
        %v1085 = vpack.c.b16 %v993, %v989
        %v1086 = vpack.c.b16 %v994, %v990
        %v1087 = vpack.c.b16 %v999, %v995
        %v1088 = vpack.c.b16 %v1000, %v996
        %v1089 = vpack.c.b16 %v1001, %v997
        %v1090 = vpack.c.b16 %v1002, %v998
        %v1091 = vpack.c.b16 %v1007, %v1003
        %v1092 = vpack.c.b16 %v1008, %v1004
        %v1093 = vpack.c.b16 %v1009, %v1005
        %v1094 = vpack.c.b16 %v1010, %v1006
        %v1095 = vpack.c.b16 %v1015, %v1011
        %v1096 = vpack.c.b16 %v1016, %v1012
        %v1097 = vpack.c.b16 %v1017, %v1013
        %v1098 = vpack.c.b16 %v1018, %v1014
        %v1099 = vpack.c.b16 %v1023, %v1019
        %v1100 = vpack.c.b16 %v1024, %v1020
        %v1101 = vpack.c.b16 %v1025, %v1021
        %v1102 = vpack.c.b16 %v1026, %v1022
        %v1103 = vpack.c.b16 %v1031, %v1027
        %v1104 = vpack.c.b16 %v1032, %v1028
        %v1105 = vpack.c.b16 %v1033, %v1029
        %v1106 = vpack.c.b16 %v1034, %v1030
        %v1107 = vpack.c.b16 %v1039, %v1035
        %v1108 = vpack.c.b16 %v1040, %v1036
        %v1109 = vpack.c.b16 %v1041, %v1037
        %v1110 = vpack.c.b16 %v1042, %v1038
        %v1111 = vpack.c.b16 %v1047, %v1043
        %v1112 = vpack.c.b16 %v1048, %v1044
        %v1113 = vpack.c.b16 %v1049, %v1045
        %v1114 = vpack.c.b16 %v1050, %v1046
        %v1115 = vpack.c.b16 %v1055, %v1051
        %v1116 = vpack.c.b16 %v1056, %v1052
        %v1117 = vpack.c.b16 %v1057, %v1053
        %v1118 = vpack.c.b16 %v1058, %v1054
        %v1180 = vsel %vm754, %v877, 0
        %1182 = vmatpush.bf16.msra.mxu0 %v1087
        %1183 = vmatpush.bf16.msra.mxu0 %v1083
        %1184 = vmatpush.bf16.msra.mxu0 %v1079
        %1185 = vmatpush.bf16.msra.mxu0 %v1075
        %1186 = vmatpush.bf16.msra.mxu0 %v1071
        %1187 = vmatpush.bf16.msra.mxu0 %v1067
        %1188 = vmatpush.bf16.msra.mxu0 %v1063
        %1189 = vmatpush.bf16.msra.mxu0 %v1059
        %1190 = vmatmul.bf16.gmra.mxu0 %v876
        %v1191 = vpop.f32.mrf.mxu0
        %v1192 = vadd.f32 %v782, %v1191
        %v1193 = vpop.f32.mrf.mxu0
        %v1194 = vadd.f32 %v784, %v1193
        %1195 = vdwg.mxu0
        %1196 = vmatpush.bf16.msra.mxu0 0
        %1197 = vmatpush.bf16.msra.mxu0 %v1115
        %1198 = vmatpush.bf16.msra.mxu0 %v1111
        %1199 = vmatpush.bf16.msra.mxu0 %v1107
        %1200 = vmatpush.bf16.msra.mxu0 %v1103
        %1201 = vmatpush.bf16.msra.mxu0 %v1099
        %1202 = vmatpush.bf16.msra.mxu0 %v1095
        %1203 = vmatpush.bf16.msra.mxu0 %v1091
        %1204 = vmatmul.bf16.gmra.mxu0 %v1180
        %v1205 = vpop.f32.mrf.mxu0
        %v1206 = vadd.f32 %v1192, %v1205
        %v1207 = vpop.f32.mrf.mxu0
        %v1208 = vadd.f32 %v1194, %v1207
        %1209 = vdwg.mxu0
        %1210 = vmatpush.bf16.msra.mxu0 %v1088
        %1211 = vmatpush.bf16.msra.mxu0 %v1084
        %1212 = vmatpush.bf16.msra.mxu0 %v1080
        %1213 = vmatpush.bf16.msra.mxu0 %v1076
        %1214 = vmatpush.bf16.msra.mxu0 %v1072
        %1215 = vmatpush.bf16.msra.mxu0 %v1068
        %1216 = vmatpush.bf16.msra.mxu0 %v1064
        %1217 = vmatpush.bf16.msra.mxu0 %v1060
        %1218 = vmatmul.bf16.gmra.mxu0 %v876
        %v1219 = vpop.f32.mrf.mxu0
        %v1220 = vadd.f32 %v810, %v1219
        %v1221 = vpop.f32.mrf.mxu0
        %v1222 = vadd.f32 %v812, %v1221
        %1223 = vdwg.mxu0
        %1224 = vmatpush.bf16.msra.mxu0 0
        %1225 = vmatpush.bf16.msra.mxu0 %v1116
        %1226 = vmatpush.bf16.msra.mxu0 %v1112
        %1227 = vmatpush.bf16.msra.mxu0 %v1108
        %1228 = vmatpush.bf16.msra.mxu0 %v1104
        %1229 = vmatpush.bf16.msra.mxu0 %v1100
        %1230 = vmatpush.bf16.msra.mxu0 %v1096
        %1231 = vmatpush.bf16.msra.mxu0 %v1092
        %1232 = vmatmul.bf16.gmra.mxu0 %v1180
        %v1233 = vpop.f32.mrf.mxu0
        %v1234 = vadd.f32 %v1220, %v1233
        %v1235 = vpop.f32.mrf.mxu0
        %v1236 = vadd.f32 %v1222, %v1235
        %1237 = vdwg.mxu0
        %1238 = vmatpush.bf16.msra.mxu0 %v1089
        %1239 = vmatpush.bf16.msra.mxu0 %v1085
        %1240 = vmatpush.bf16.msra.mxu0 %v1081
        %1241 = vmatpush.bf16.msra.mxu0 %v1077
        %1242 = vmatpush.bf16.msra.mxu0 %v1073
        %1243 = vmatpush.bf16.msra.mxu0 %v1069
        %1244 = vmatpush.bf16.msra.mxu0 %v1065
        %1245 = vmatpush.bf16.msra.mxu0 %v1061
        %1246 = vmatmul.bf16.gmra.mxu0 %v876
        %v1247 = vpop.f32.mrf.mxu0
        %v1248 = vadd.f32 %v838, %v1247
        %v1249 = vpop.f32.mrf.mxu0
        %v1250 = vadd.f32 %v840, %v1249
        %1251 = vdwg.mxu0
        %1252 = vmatpush.bf16.msra.mxu0 0
        %1253 = vmatpush.bf16.msra.mxu0 %v1117
        %1254 = vmatpush.bf16.msra.mxu0 %v1113
        %1255 = vmatpush.bf16.msra.mxu0 %v1109
        %1256 = vmatpush.bf16.msra.mxu0 %v1105
        %1257 = vmatpush.bf16.msra.mxu0 %v1101
        %1258 = vmatpush.bf16.msra.mxu0 %v1097
        %1259 = vmatpush.bf16.msra.mxu0 %v1093
        %1260 = vmatmul.bf16.gmra.mxu0 %v1180
        %v1261 = vpop.f32.mrf.mxu0
        %v1262 = vadd.f32 %v1248, %v1261
        %v1263 = vpop.f32.mrf.mxu0
        %v1264 = vadd.f32 %v1250, %v1263
        %1265 = vdwg.mxu0
        %1266 = vmatpush.bf16.msra.mxu0 %v1090
        %1267 = vmatpush.bf16.msra.mxu0 %v1086
        %1268 = vmatpush.bf16.msra.mxu0 %v1082
        %1269 = vmatpush.bf16.msra.mxu0 %v1078
        %1270 = vmatpush.bf16.msra.mxu0 %v1074
        %1271 = vmatpush.bf16.msra.mxu0 %v1070
        %1272 = vmatpush.bf16.msra.mxu0 %v1066
        %1273 = vmatpush.bf16.msra.mxu0 %v1062
        %1274 = vmatmul.bf16.gmra.mxu0 %v876
        %v1275 = vpop.f32.mrf.mxu0
        %v1276 = vadd.f32 %v866, %v1275
        %v1277 = vpop.f32.mrf.mxu0
        %v1278 = vadd.f32 %v868, %v1277
        %1279 = vdwg.mxu0
        %1280 = vmatpush.bf16.msra.mxu0 0
        %1281 = vmatpush.bf16.msra.mxu0 %v1118
        %1282 = vmatpush.bf16.msra.mxu0 %v1114
        %1283 = vmatpush.bf16.msra.mxu0 %v1110
        %1284 = vmatpush.bf16.msra.mxu0 %v1106
        %1285 = vmatpush.bf16.msra.mxu0 %v1102
        %1286 = vmatpush.bf16.msra.mxu0 %v1098
        %1287 = vmatpush.bf16.msra.mxu0 %v1094
        %1288 = vmatmul.bf16.gmra.mxu0 %v1180
        %v1289 = vpop.f32.mrf.mxu0
        %v1290 = vadd.f32 %v1276, %v1289
        %v1291 = vpop.f32.mrf.mxu0
        %v1292 = vadd.f32 %v1278, %v1291
        %1293 = vdwg.mxu0
        %1294 = vst [vmem:[%s316] sm:$0xff] %v1206
        %1295 = vst [vmem:[%s316 + $0x8] sm:$0xff] %v1234
        %1296 = vst [vmem:[%s316 + $0x10] sm:$0xff] %v1262
        %1297 = vst [vmem:[%s316 + $0x18] sm:$0xff] %v1290
        %1298 = vst [vmem:[%s316 + $0x20] sm:$0xff] %v1208
        %1299 = vst [vmem:[%s316 + $0x28] sm:$0xff] %v1236
        %1300 = vst [vmem:[%s316 + $0x30] sm:$0xff] %v1264
        %1301 = vst [vmem:[%s316 + $0x38] sm:$0xff] %v1292
        %s1302 = sand.u32 %s145, 1
        %s1303 = scalar_lea.sflag [#allocation4], %s1302
        %s1304 = sand.u32 %s145, 1
        %s1305 = smul.addr %s1304, 64
        %s1306 = scalar_lea.vmem [#allocation10], %s1305
        // Predicated region
        $region53: #{tpu_custom_call.1} parent=35 // pred_check
          %p1307 = pneg %p155
        $region54: #{tpu_custom_call.1} parent=35 // pred_check_branch
          %1309 = sbr.rel (%p1307) target = $region56
        $region55: #{tpu_custom_call.1} parent=35 // pred_region
          %s1310 = smul.u32 2, %s30
          %1312 = vsyncadd %s1303, 0
          %s1313 = smul.addr %s1310, 4
          %s1314 = smul.addr %s29, 8
          %s1315 = sadd.s32 %s1313, %s1314
          %s1316 = smul.addr %s1315, 8
          %s1317 = scalar_lea.hbm %s4, %s1316
          %s1318 = sshll.u32 %s1306, 4
          %s1319 = int_to_ptr.vmem [resolvable:$true] %s1318
          %s1320 = sshll.u32 %s1317, 4
          %s1321 = int_to_ptr.hbm [resolvable:$true] %s1320
          %1326 = dma.vmem_to_hbm [thread:$0]  %s1319, 1024, %s1321, %s1303, 512, 512, 32
        $region56: #{tpu_custom_call.1} parent=35 // pred_fallthru
          _
      $region36: #{tpu_custom_call.1} parent=5 // pred_fallthru
        _
      %p1327 = scmp.le.s32.totalorder 2, %s20
      // Predicated region
      $region57: #{tpu_custom_call.1} parent=5 // pred_check
        %p1328 = pneg %p1327
      $region58: #{tpu_custom_call.1} parent=5 // pred_check_branch
        %1330 = sbr.rel (%p1328) target = $region60
      $region59: #{tpu_custom_call.1} parent=5 // pred_region
        %s1331 = ssub.s32 %s20, 2
        // Predicated region
        $region61: #{tpu_custom_call.1} parent=59 // pred_check
          %p1332 = pneg %p161
        $region62: #{tpu_custom_call.1} parent=59 // pred_check_branch
          %1334 = sbr.rel (%p1332) target = $region64
        $region63: #{tpu_custom_call.1} parent=59 // pred_region
          %s1335 = sand.u32 %s146, 1
          %s1336 = scalar_lea.sflag [#allocation4], %s1335
          %s1337 = sand.u32 %s146, 1
          %s1338 = smul.addr %s1337, 64
          %s1339 = scalar_lea.vmem [#allocation10], %s1338
          %1341 = dma.done %s1336, 1024
        $region64: #{tpu_custom_call.1} parent=59 // pred_fallthru
          _
      $region60: #{tpu_custom_call.1} parent=5 // pred_fallthru
        _
    $region6: #{tpu_custom_call.1} parent=1 // loop_footer
      %s24 = sadd.s32 1, %s20
    $region7: #{tpu_custom_call.1} parent=1 // loop_footer_branch
      %19 = sbr.rel target = $region3
    $region8: #{tpu_custom_call.1} parent=1 // loop_exit
      _
    %1342 = vsyncpa [#allocation3], 1
    %s1343 = scalar_lea.sflag [#allocation3], 1
    %1344 = vsyncpa %s1343, 1
    %1345 = vsyncpa [#allocation6], 1
    %s1346 = scalar_lea.sflag [#allocation6], 1
    %1347 = vsyncpa %s1346, 1
    %1348 = vsyncpa [#allocation9], 1
    %1349 = vsyncpa [#allocation4], 1
    %s1350 = scalar_lea.sflag [#allocation4], 1
    %1351 = vsyncpa %s1350, 1

</llo_original>
